<compile_context>
chip_gen: v7x
topology: tpu7x:2x2x1
jax: 0.10.0
libtpu: 0.0.40
codegen_flags: <defaults>
</compile_context>

<pallas_src>
import functools

import jax
import jax.numpy as jnp
from jax.experimental import pallas as pl
from jax.experimental.pallas import tpu as pltpu


def _softplus(x):
    # matches F.softplus: log(1 + exp(x)), numerically stable
    return jnp.logaddexp(x, 0.0)


def _round_up(v, m):
    return -(-v // m) * m


def _device_vmem_bytes():
    try:
        info = pltpu.get_tpu_info()
        v = int(getattr(info, "vmem_capacity_bytes", 0) or 0)
        if v > 0:
            return v
    except Exception:
        pass
    return 64 * 1024 * 1024                    # conservative (v7x-safe) default


def _pick_tile(B, H, itemsize, vmem_cap, tile_rows):
    """Pick batch-tile rows + scoped-VMEM limit, accounting for (8,128) padding."""
    H_pad = _round_up(H, 128)                  # lane padding in VMEM
    if vmem_cap <= 64 * 1024 * 1024:           # v7x: 64 MiB per TC -> headroom
        vmem_limit = 48 * 1024 * 1024
    else:                                      # v5e / v6e: 128 MiB physical
        vmem_limit = min(int(0.8 * vmem_cap), 100 * 1024 * 1024)

    if tile_rows is not None:
        TB = max(1, min(int(tile_rows), B))
    else:
        usable = int(0.85 * vmem_limit)        # 15% slack: weights/sems/compiler scratch
        tb_vmem = usable // (7 * 2 * H_pad * itemsize)      # 7 streams x 2 pipeline bufs
        tb_bytes = (4 * 1024 * 1024) // (H_pad * itemsize)  # ~4 MiB per input tile
        TB = max(8, min(tb_vmem, tb_bytes))
    if TB >= B:
        return B, vmem_limit                   # single tile: block == full array dims
    return max(8, (TB // 8) * 8), vmem_limit   # sublane-aligned partial tiles


def _dim_loss_kernel(batch_size, need_mask,
                     coef_ref,
                     x_ref, xn_ref, fg_ref, fgn_ref, yg_ref, yd_ref, ydn_ref,
                     wmax_a_ref, wmax_b_ref, wmin_a_ref, wmin_b_ref,
                     out_ref):
    f32 = jnp.float32
    TB = x_ref.shape[0]

    # relu is applied AFTER the concat in torch; since cat is along features,
    # relu(cat(a, b)) @ W^T == relu(a) @ Wa^T + relu(b) @ Wb^T
    relu = lambda r: jnp.maximum(r[...].astype(f32), 0.0)
    yg = relu(yg_ref)
    x = relu(x_ref)
    xn = relu(xn_ref)
    fg = relu(fg_ref)
    fgn = relu(fgn_ref)
    yd = relu(yd_ref)
    ydn = relu(ydn_ref)

    wmax_a = wmax_a_ref[...]                   # (1, H), already f32, resident
    wmax_b = wmax_b_ref[...]
    wmin_a = wmin_a_ref[...]
    wmin_b = wmin_b_ref[...]

    alpha = coef_ref[0]
    gamma = coef_ref[1]
    delta = coef_ref[2]
    bmax = coef_ref[3]
    bmin = coef_ref[4]

    def half_dot(a, w_row):
        # (TB, H) * (1, H) -> lane reduce -> (TB, 1)
        return jnp.sum(a * w_row, axis=-1, keepdims=True)

    # shared half-dots computed once (CSE: 9 passes instead of 12)
    yg_wmax_a = half_dot(yg, wmax_a)
    yg_wmax_b = half_dot(yg, wmax_b)
    yg_wmin_b = half_dot(yg, wmin_b)

    s1 = yg_wmax_a + half_dot(fg, wmax_b) + bmax    # max_d(y_g, f_g)
    s2 = yg_wmax_a + half_dot(fgn, wmax_b) + bmax   # max_d(y_g, fg_n)
    s3 = half_dot(x, wmax_a) + yg_wmax_b + bmax     # max_d(x,   y_g)
    s4 = half_dot(xn, wmax_a) + yg_wmax_b + bmax    # max_d(x_n, y_g)
    s5 = half_dot(yd, wmin_a) + yg_wmin_b + bmin    # min_d(y_d,  y_g) pre-norm
    s6 = half_dot(ydn, wmin_a) + yg_wmin_b + bmin   # min_d(yd_n, y_g) pre-norm

    # F.normalize(p=2, dim=1) on a (B, 1) output -> s / max(|s|, 1e-12)
    n5 = s5 / jnp.maximum(jnp.abs(s5), 1e-12)
    n6 = s6 / jnp.maximum(jnp.abs(s6), 1e-12)

    # loss = alpha*(mean sp(s2) + mean sp(-s1))
    #      + delta*(mean sp(s4) + mean sp(-s3))
    #      - gamma*(mean sp(-n5) + mean sp(n6))
    per_row = (alpha * (_softplus(s2) + _softplus(-s1))
               + delta * (_softplus(s4) + _softplus(-s3))
               - gamma * (_softplus(-n5) + _softplus(n6)))      # (TB, 1)

    if need_mask:
        # mask ragged / padded rows (kept immediately before the reduction so
        # padded-row garbage -- incl. NaN -- is removed by the select)
        rows = (pl.program_id(0) * TB
                + jax.lax.broadcasted_iota(jnp.int32, (TB, 1), 0))
        per_row = jnp.where(rows < batch_size, per_row, 0.0)

    # one (1,1) partial sum per grid step; wrapper does the final (pairwise) sum
    out_ref[0] = jnp.sum(per_row, axis=(0, 1), keepdims=True)


def ufd_deep_infomax_loss(x, x_n, f_g, fg_n, f_d, fd_n, y_g, y_d, yd_n, params,
                          alpha=0.3, beta=1.0, gamma=0.2, delta=1.0,
                          tile_rows=None, stream_dtype=None):
    """JAX/Pallas equivalent of UFDDeepInfoMaxLossModel.forward. Returns scalar."""
    del f_d, fd_n  # unused in the reference forward (kept for signature parity)
    # beta is a model attribute but never used in the reference forward pass.
    B, H = x.shape
    wmax, bmax, wmin, bmin = params            # (1, 2H), (1,), (1, 2H), (1,)

    f32 = jnp.float32
    wmax = wmax.astype(f32)
    wmin = wmin.astype(f32)
    wmax_a, wmax_b = wmax[:, :H], wmax[:, H:]
    wmin_a, wmin_b = wmin[:, :H], wmin[:, H:]

    feats = (x, x_n, f_g, fg_n, y_g, y_d, yd_n)
    if stream_dtype is not None:
        # optional bandwidth saver for this HBM-bound kernel (e.g. bf16)
        feats = tuple(f.astype(stream_dtype) for f in feats)
    itemsize = jnp.dtype(feats[0].dtype).itemsize

    vmem_cap = _device_vmem_bytes()
    TB, vmem_limit = _pick_tile(B, H, itemsize, vmem_cap, tile_rows)
    NT = -(-B // TB)                           # number of batch tiles
    need_mask = (B % TB) != 0

    coefs = jnp.stack([
        jnp.asarray(alpha, f32),
        jnp.asarray(gamma, f32),
        jnp.asarray(delta, f32),
        jnp.reshape(bmax, (-1,)).astype(f32)[0],
        jnp.reshape(bmin, (-1,)).astype(f32)[0],
    ])

    # Features: streamed (TB, H) tiles, one per grid step
    feat_spec = pl.BlockSpec((TB, H), lambda i, cf: (i, 0))
    # Weights: constant index map -> DMA'd once, resident across the grid
    w_spec = pl.BlockSpec((1, H), lambda i, cf: (0, 0))
    # One (1,1,1) partial-sum block per grid step (trailing dims equal full
    # array dims, so the (8,128) layout rule is satisfied)
    out_spec = pl.BlockSpec((1, 1, 1), lambda i, cf: (i, 0, 0))

    grid_spec = pltpu.PrefetchScalarGridSpec(
        num_scalar_prefetch=1,
        grid=(NT,),
        in_specs=[feat_spec] * 7 + [w_spec] * 4,
        out_specs=out_spec,
    )

    partials = pl.pallas_call(
        functools.partial(_dim_loss_kernel, B, need_mask),
        out_shape=jax.ShapeDtypeStruct((NT, 1, 1), jnp.float32),
        grid_spec=grid_spec,
        compiler_params=pltpu.CompilerParams(
            dimension_semantics=("parallel",),   # megacore split on 2-TC chips
            vmem_limit_bytes=vmem_limit,
        ),
    )(coefs, *feats, wmax_a, wmax_b, wmin_a, wmin_b)

    return jnp.sum(partials) * (1.0 / B)


def _reference_loss(x, x_n, f_g, fg_n, y_g, y_d, yd_n, params,
                    alpha=0.3, gamma=0.2, delta=1.0):
    """Pure-JAX reference for verification."""
    wmax, bmax, wmin, bmin = params

    def max_d(a, b):
        h = jnp.maximum(jnp.concatenate([a, b], axis=1), 0.0)
        return h @ wmax.T + bmax

    def min_d(a, b):
        h = jnp.maximum(jnp.concatenate([a, b], axis=1), 0.0)
        s = h @ wmin.T + bmin
        return s / jnp.maximum(jnp.abs(s), 1e-12)

    sp = lambda v: jnp.logaddexp(v, 0.0)
    ej = -jnp.mean(sp(-max_d(y_g, f_g)))
    em = jnp.mean(sp(max_d(y_g, fg_n)))
    ga = (em - ej) * alpha
    ej = -jnp.mean(sp(-max_d(x, y_g)))
    em = jnp.mean(sp(max_d(x_n, y_g)))
    gb = (em - ej) * delta
    ej = -jnp.mean(sp(-min_d(y_d, y_g)))
    em = jnp.mean(sp(min_d(yd_n, y_g)))
    lb = (ej - em) * gamma
    return ga + gb + lb


if __name__ == "__main__":
    initrange = 0.1

    def make_inputs(B, H, seed):
        key = jax.random.PRNGKey(seed)
        keys = jax.random.split(key, 11)
        feats = [jax.random.normal(k, (B, H), dtype=jnp.float32) for k in keys[:9]]
        wmax = jax.random.uniform(keys[9], (1, 2 * H), jnp.float32,
                                  -initrange, initrange)
        bmax = jnp.zeros((1,), jnp.float32)
        wmin = jax.random.uniform(keys[10], (1, 2 * H), jnp.float32,
                                  -initrange, initrange)
        bmin = jnp.zeros((1,), jnp.float32)
        return feats, (wmax, bmax, wmin, bmin)

    # Case 1: tiny shapes (single tile).
    B, H = 8, 32
    feats, params = make_inputs(B, H, seed=0)
    x, x_n, f_g, fg_n, f_d, fd_n, y_g, y_d, yd_n = feats
    loss = jax.block_until_ready(
        ufd_deep_infomax_loss(x, x_n, f_g, fg_n, f_d, fd_n, y_g, y_d, yd_n, params))
    ref = jax.block_until_ready(
        _reference_loss(x, x_n, f_g, fg_n, y_g, y_d, yd_n, params))
    assert jnp.allclose(loss, ref, rtol=1e-5, atol=1e-5), (loss, ref)

    # Case 2: forced multi-tile grid with a ragged last tile (mask path).
    B2, H2 = 40, 32
    feats2, params2 = make_inputs(B2, H2, seed=1)
    x2, xn2, fg2, fgn2, fd2, fdn2, yg2, yd2, ydn2 = feats2
    loss2 = jax.block_until_ready(
        ufd_deep_infomax_loss(x2, xn2, fg2, fgn2, fd2, fdn2, yg2, yd2, ydn2,
                              params2, tile_rows=16))
    ref2 = jax.block_until_ready(
        _reference_loss(x2, xn2, fg2, fgn2, yg2, yd2, ydn2, params2))
    assert jnp.allclose(loss2, ref2, rtol=1e-5, atol=1e-5), (loss2, ref2)

    # Case 3: auto tile sizing path with several large tiles + ragged remainder.
    B3, H3 = 12345, 64
    feats3, params3 = make_inputs(B3, H3, seed=2)
    x3, xn3, fg3, fgn3, fd3, fdn3, yg3, yd3, ydn3 = feats3
    loss3 = jax.block_until_ready(
        ufd_deep_infomax_loss(x3, xn3, fg3, fgn3, fd3, fdn3, yg3, yd3, ydn3, params3))
    ref3 = jax.block_until_ready(
        _reference_loss(x3, xn3, fg3, fgn3, yg3, yd3, ydn3, params3))
    assert jnp.allclose(loss3, ref3, rtol=1e-4, atol=1e-4), (loss3, ref3)

    # bf16 streaming knob: smoke test (compiles / runs / finite result).
    loss_bf16 = jax.block_until_ready(
        ufd_deep_infomax_loss(x, x_n, f_g, fg_n, f_d, fd_n, y_g, y_d, yd_n, params,
                              stream_dtype=jnp.bfloat16))
    assert bool(jnp.isfinite(loss_bf16)), loss_bf16

    print("KERNEL_OK")
</pallas_src>

<mosaic_0001>
module attributes {stable_mosaic.version = 11 : i64} {
  func.func @_dim_loss_kernel(%arg0: i32, %arg1: memref<5xf32, #tpu.memory_space<smem>>, %arg2: memref<8x32xf32, #tpu.memory_space<vmem>>, %arg3: memref<8x32xf32, #tpu.memory_space<vmem>>, %arg4: memref<8x32xf32, #tpu.memory_space<vmem>>, %arg5: memref<8x32xf32, #tpu.memory_space<vmem>>, %arg6: memref<8x32xf32, #tpu.memory_space<vmem>>, %arg7: memref<8x32xf32, #tpu.memory_space<vmem>>, %arg8: memref<8x32xf32, #tpu.memory_space<vmem>>, %arg9: memref<1x32xf32, #tpu.memory_space<vmem>>, %arg10: memref<1x32xf32, #tpu.memory_space<vmem>>, %arg11: memref<1x32xf32, #tpu.memory_space<vmem>>, %arg12: memref<1x32xf32, #tpu.memory_space<vmem>>, %arg13: memref<1x1x1xf32, #tpu.memory_space<vmem>>) attributes {dimension_semantics = [#tpu.dimension_semantics<parallel>], iteration_bounds = array<i64: 1>, scalar_prefetch = 1 : i64, scratch_operands = 0 : i64, tpu.core_type = #tpu.core_type<tc>, window_params = [{transform_indices = @transform_0, window_bounds = array<i64: 8, 32>}, {transform_indices = @transform_1, window_bounds = array<i64: 8, 32>}, {transform_indices = @transform_2, window_bounds = array<i64: 8, 32>}, {transform_indices = @transform_3, window_bounds = array<i64: 8, 32>}, {transform_indices = @transform_4, window_bounds = array<i64: 8, 32>}, {transform_indices = @transform_5, window_bounds = array<i64: 8, 32>}, {transform_indices = @transform_6, window_bounds = array<i64: 8, 32>}, {pipeline_mode = #tpu.pipeline_mode<synchronous>, transform_indices = @transform_7, window_bounds = array<i64: 1, 32>}, {pipeline_mode = #tpu.pipeline_mode<synchronous>, transform_indices = @transform_8, window_bounds = array<i64: 1, 32>}, {pipeline_mode = #tpu.pipeline_mode<synchronous>, transform_indices = @transform_9, window_bounds = array<i64: 1, 32>}, {pipeline_mode = #tpu.pipeline_mode<synchronous>, transform_indices = @transform_10, window_bounds = array<i64: 1, 32>}, {transform_indices = @transform_11, window_bounds = array<i64: 1, 1, 1>}]} {
    %c0 = arith.constant 0 : index
    %c0_0 = arith.constant 0 : index
    %0 = vector.load %arg6[%c0, %c0_0] : memref<8x32xf32, #tpu.memory_space<vmem>>, vector<8x32xf32>
    %cst = arith.constant 0.000000e+00 : f32
    %1 = vector.broadcast %cst : f32 to vector<8x32xf32>
    %2 = arith.maximumf %0, %1 : vector<8x32xf32>
    %c0_1 = arith.constant 0 : index
    %c0_2 = arith.constant 0 : index
    %3 = vector.load %arg2[%c0_1, %c0_2] : memref<8x32xf32, #tpu.memory_space<vmem>>, vector<8x32xf32>
    %cst_3 = arith.constant 0.000000e+00 : f32
    %4 = vector.broadcast %cst_3 : f32 to vector<8x32xf32>
    %5 = arith.maximumf %3, %4 : vector<8x32xf32>
    %c0_4 = arith.constant 0 : index
    %c0_5 = arith.constant 0 : index
    %6 = vector.load %arg3[%c0_4, %c0_5] : memref<8x32xf32, #tpu.memory_space<vmem>>, vector<8x32xf32>
    %cst_6 = arith.constant 0.000000e+00 : f32
    %7 = vector.broadcast %cst_6 : f32 to vector<8x32xf32>
    %8 = arith.maximumf %6, %7 : vector<8x32xf32>
    %c0_7 = arith.constant 0 : index
    %c0_8 = arith.constant 0 : index
    %9 = vector.load %arg4[%c0_7, %c0_8] : memref<8x32xf32, #tpu.memory_space<vmem>>, vector<8x32xf32>
    %cst_9 = arith.constant 0.000000e+00 : f32
    %10 = vector.broadcast %cst_9 : f32 to vector<8x32xf32>
    %11 = arith.maximumf %9, %10 : vector<8x32xf32>
    %c0_10 = arith.constant 0 : index
    %c0_11 = arith.constant 0 : index
    %12 = vector.load %arg5[%c0_10, %c0_11] : memref<8x32xf32, #tpu.memory_space<vmem>>, vector<8x32xf32>
    %cst_12 = arith.constant 0.000000e+00 : f32
    %13 = vector.broadcast %cst_12 : f32 to vector<8x32xf32>
    %14 = arith.maximumf %12, %13 : vector<8x32xf32>
    %c0_13 = arith.constant 0 : index
    %c0_14 = arith.constant 0 : index
    %15 = vector.load %arg7[%c0_13, %c0_14] : memref<8x32xf32, #tpu.memory_space<vmem>>, vector<8x32xf32>
    %cst_15 = arith.constant 0.000000e+00 : f32
    %16 = vector.broadcast %cst_15 : f32 to vector<8x32xf32>
    %17 = arith.maximumf %15, %16 : vector<8x32xf32>
    %c0_16 = arith.constant 0 : index
    %c0_17 = arith.constant 0 : index
    %18 = vector.load %arg8[%c0_16, %c0_17] : memref<8x32xf32, #tpu.memory_space<vmem>>, vector<8x32xf32>
    %cst_18 = arith.constant 0.000000e+00 : f32
    %19 = vector.broadcast %cst_18 : f32 to vector<8x32xf32>
    %20 = arith.maximumf %18, %19 : vector<8x32xf32>
    %c0_19 = arith.constant 0 : index
    %c0_20 = arith.constant 0 : index
    %21 = vector.load %arg9[%c0_19, %c0_20] : memref<1x32xf32, #tpu.memory_space<vmem>>, vector<1x32xf32>
    %c0_21 = arith.constant 0 : index
    %c0_22 = arith.constant 0 : index
    %22 = vector.load %arg10[%c0_21, %c0_22] : memref<1x32xf32, #tpu.memory_space<vmem>>, vector<1x32xf32>
    %c0_23 = arith.constant 0 : index
    %c0_24 = arith.constant 0 : index
    %23 = vector.load %arg11[%c0_23, %c0_24] : memref<1x32xf32, #tpu.memory_space<vmem>>, vector<1x32xf32>
    %c0_25 = arith.constant 0 : index
    %c0_26 = arith.constant 0 : index
    %24 = vector.load %arg12[%c0_25, %c0_26] : memref<1x32xf32, #tpu.memory_space<vmem>>, vector<1x32xf32>
    %c0_27 = arith.constant 0 : index
    %25 = memref.load %arg1[%c0_27] : memref<5xf32, #tpu.memory_space<smem>>
    %c1 = arith.constant 1 : index
    %26 = memref.load %arg1[%c1] : memref<5xf32, #tpu.memory_space<smem>>
    %c2 = arith.constant 2 : index
    %27 = memref.load %arg1[%c2] : memref<5xf32, #tpu.memory_space<smem>>
    %c3 = arith.constant 3 : index
    %28 = memref.load %arg1[%c3] : memref<5xf32, #tpu.memory_space<smem>>
    %c4 = arith.constant 4 : index
    %29 = memref.load %arg1[%c4] : memref<5xf32, #tpu.memory_space<smem>>
    %30 = vector.broadcast %21 : vector<1x32xf32> to vector<8x32xf32>
    %31 = arith.mulf %2, %30 : vector<8x32xf32>
    %cst_28 = arith.constant dense<0.000000e+00> : vector<8xf32>
    %32 = vector.multi_reduction <add>, %31, %cst_28 [1] : vector<8x32xf32> to vector<8xf32>
    %33 = vector.shape_cast %32 : vector<8xf32> to vector<8x1xf32>
    %34 = vector.broadcast %22 : vector<1x32xf32> to vector<8x32xf32>
    %35 = arith.mulf %2, %34 : vector<8x32xf32>
    %cst_29 = arith.constant dense<0.000000e+00> : vector<8xf32>
    %36 = vector.multi_reduction <add>, %35, %cst_29 [1] : vector<8x32xf32> to vector<8xf32>
    %37 = vector.shape_cast %36 : vector<8xf32> to vector<8x1xf32>
    %38 = vector.broadcast %24 : vector<1x32xf32> to vector<8x32xf32>
    %39 = arith.mulf %2, %38 : vector<8x32xf32>
    %cst_30 = arith.constant dense<0.000000e+00> : vector<8xf32>
    %40 = vector.multi_reduction <add>, %39, %cst_30 [1] : vector<8x32xf32> to vector<8xf32>
    %41 = vector.shape_cast %40 : vector<8xf32> to vector<8x1xf32>
    %42 = vector.broadcast %22 : vector<1x32xf32> to vector<8x32xf32>
    %43 = arith.mulf %11, %42 : vector<8x32xf32>
    %cst_31 = arith.constant dense<0.000000e+00> : vector<8xf32>
    %44 = vector.multi_reduction <add>, %43, %cst_31 [1] : vector<8x32xf32> to vector<8xf32>
    %45 = vector.shape_cast %44 : vector<8xf32> to vector<8x1xf32>
    %46 = arith.addf %33, %45 : vector<8x1xf32>
    %47 = vector.broadcast %28 : f32 to vector<8x1xf32>
    %48 = arith.addf %46, %47 : vector<8x1xf32>
    %49 = vector.broadcast %22 : vector<1x32xf32> to vector<8x32xf32>
    %50 = arith.mulf %14, %49 : vector<8x32xf32>
    %cst_32 = arith.constant dense<0.000000e+00> : vector<8xf32>
    %51 = vector.multi_reduction <add>, %50, %cst_32 [1] : vector<8x32xf32> to vector<8xf32>
    %52 = vector.shape_cast %51 : vector<8xf32> to vector<8x1xf32>
    %53 = arith.addf %33, %52 : vector<8x1xf32>
    %54 = vector.broadcast %28 : f32 to vector<8x1xf32>
    %55 = arith.addf %53, %54 : vector<8x1xf32>
    %56 = vector.broadcast %21 : vector<1x32xf32> to vector<8x32xf32>
    %57 = arith.mulf %5, %56 : vector<8x32xf32>
    %cst_33 = arith.constant dense<0.000000e+00> : vector<8xf32>
    %58 = vector.multi_reduction <add>, %57, %cst_33 [1] : vector<8x32xf32> to vector<8xf32>
    %59 = vector.shape_cast %58 : vector<8xf32> to vector<8x1xf32>
    %60 = arith.addf %59, %37 : vector<8x1xf32>
    %61 = vector.broadcast %28 : f32 to vector<8x1xf32>
    %62 = arith.addf %60, %61 : vector<8x1xf32>
    %63 = vector.broadcast %21 : vector<1x32xf32> to vector<8x32xf32>
    %64 = arith.mulf %8, %63 : vector<8x32xf32>
    %cst_34 = arith.constant dense<0.000000e+00> : vector<8xf32>
    %65 = vector.multi_reduction <add>, %64, %cst_34 [1] : vector<8x32xf32> to vector<8xf32>
    %66 = vector.shape_cast %65 : vector<8xf32> to vector<8x1xf32>
    %67 = arith.addf %66, %37 : vector<8x1xf32>
    %68 = vector.broadcast %28 : f32 to vector<8x1xf32>
    %69 = arith.addf %67, %68 : vector<8x1xf32>
    %70 = vector.broadcast %23 : vector<1x32xf32> to vector<8x32xf32>
    %71 = arith.mulf %17, %70 : vector<8x32xf32>
    %cst_35 = arith.constant dense<0.000000e+00> : vector<8xf32>
    %72 = vector.multi_reduction <add>, %71, %cst_35 [1] : vector<8x32xf32> to vector<8xf32>
    %73 = vector.shape_cast %72 : vector<8xf32> to vector<8x1xf32>
    %74 = arith.addf %73, %41 : vector<8x1xf32>
    %75 = vector.broadcast %29 : f32 to vector<8x1xf32>
    %76 = arith.addf %74, %75 : vector<8x1xf32>
    %77 = vector.broadcast %23 : vector<1x32xf32> to vector<8x32xf32>
    %78 = arith.mulf %20, %77 : vector<8x32xf32>
    %cst_36 = arith.constant dense<0.000000e+00> : vector<8xf32>
    %79 = vector.multi_reduction <add>, %78, %cst_36 [1] : vector<8x32xf32> to vector<8xf32>
    %80 = vector.shape_cast %79 : vector<8xf32> to vector<8x1xf32>
    %81 = arith.addf %80, %41 : vector<8x1xf32>
    %82 = vector.broadcast %29 : f32 to vector<8x1xf32>
    %83 = arith.addf %81, %82 : vector<8x1xf32>
    %84 = math.absf %76 : vector<8x1xf32>
    %cst_37 = arith.constant 9.99999996E-13 : f32
    %85 = vector.broadcast %cst_37 : f32 to vector<8x1xf32>
    %86 = arith.maximumf %84, %85 : vector<8x1xf32>
    %87 = arith.divf %76, %86 : vector<8x1xf32>
    %88 = math.absf %83 : vector<8x1xf32>
    %cst_38 = arith.constant 9.99999996E-13 : f32
    %89 = vector.broadcast %cst_38 : f32 to vector<8x1xf32>
    %90 = arith.maximumf %88, %89 : vector<8x1xf32>
    %91 = arith.divf %83, %90 : vector<8x1xf32>
    %cst_39 = arith.constant 0.000000e+00 : f32
    %92 = vector.broadcast %cst_39 : f32 to vector<8x1xf32>
    %93 = arith.maximumf %55, %92 : vector<8x1xf32>
    %94 = vector.broadcast %cst_39 : f32 to vector<8x1xf32>
    %95 = arith.subf %55, %94 : vector<8x1xf32>
    %96 = arith.cmpf one, %95, %95 : vector<8x1xf32>
    %97 = vector.broadcast %cst_39 : f32 to vector<8x1xf32>
    %98 = arith.addf %55, %97 : vector<8x1xf32>
    %99 = math.absf %95 : vector<8x1xf32>
    %cst_40 = arith.constant 0.000000e+00 : f32
    %100 = vector.broadcast %cst_40 : f32 to vector<8x1xf32>
    %101 = arith.subf %100, %99 : vector<8x1xf32>
    %102 = math.exp %101 : vector<8x1xf32>
    %103 = math.log1p %102 : vector<8x1xf32>
    %104 = arith.addf %93, %103 : vector<8x1xf32>
    %105 = arith.select %96, %98, %104 : vector<8x1xi1>, vector<8x1xf32>
    %cst_41 = arith.constant 0.000000e+00 : f32
    %106 = vector.broadcast %cst_41 : f32 to vector<8x1xf32>
    %107 = arith.subf %106, %48 : vector<8x1xf32>
    %cst_42 = arith.constant 0.000000e+00 : f32
    %108 = vector.broadcast %cst_42 : f32 to vector<8x1xf32>
    %109 = arith.maximumf %107, %108 : vector<8x1xf32>
    %110 = vector.broadcast %cst_42 : f32 to vector<8x1xf32>
    %111 = arith.subf %107, %110 : vector<8x1xf32>
    %112 = arith.cmpf one, %111, %111 : vector<8x1xf32>
    %113 = vector.broadcast %cst_42 : f32 to vector<8x1xf32>
    %114 = arith.addf %107, %113 : vector<8x1xf32>
    %115 = math.absf %111 : vector<8x1xf32>
    %cst_43 = arith.constant 0.000000e+00 : f32
    %116 = vector.broadcast %cst_43 : f32 to vector<8x1xf32>
    %117 = arith.subf %116, %115 : vector<8x1xf32>
    %118 = math.exp %117 : vector<8x1xf32>
    %119 = math.log1p %118 : vector<8x1xf32>
    %120 = arith.addf %109, %119 : vector<8x1xf32>
    %121 = arith.select %112, %114, %120 : vector<8x1xi1>, vector<8x1xf32>
    %122 = arith.addf %105, %121 : vector<8x1xf32>
    %123 = vector.broadcast %25 : f32 to vector<8x1xf32>
    %124 = arith.mulf %123, %122 : vector<8x1xf32>
    %cst_44 = arith.constant 0.000000e+00 : f32
    %125 = vector.broadcast %cst_44 : f32 to vector<8x1xf32>
    %126 = arith.maximumf %69, %125 : vector<8x1xf32>
    %127 = vector.broadcast %cst_44 : f32 to vector<8x1xf32>
    %128 = arith.subf %69, %127 : vector<8x1xf32>
    %129 = arith.cmpf one, %128, %128 : vector<8x1xf32>
    %130 = vector.broadcast %cst_44 : f32 to vector<8x1xf32>
    %131 = arith.addf %69, %130 : vector<8x1xf32>
    %132 = math.absf %128 : vector<8x1xf32>
    %cst_45 = arith.constant 0.000000e+00 : f32
    %133 = vector.broadcast %cst_45 : f32 to vector<8x1xf32>
    %134 = arith.subf %133, %132 : vector<8x1xf32>
    %135 = math.exp %134 : vector<8x1xf32>
    %136 = math.log1p %135 : vector<8x1xf32>
    %137 = arith.addf %126, %136 : vector<8x1xf32>
    %138 = arith.select %129, %131, %137 : vector<8x1xi1>, vector<8x1xf32>
    %cst_46 = arith.constant 0.000000e+00 : f32
    %139 = vector.broadcast %cst_46 : f32 to vector<8x1xf32>
    %140 = arith.subf %139, %62 : vector<8x1xf32>
    %cst_47 = arith.constant 0.000000e+00 : f32
    %141 = vector.broadcast %cst_47 : f32 to vector<8x1xf32>
    %142 = arith.maximumf %140, %141 : vector<8x1xf32>
    %143 = vector.broadcast %cst_47 : f32 to vector<8x1xf32>
    %144 = arith.subf %140, %143 : vector<8x1xf32>
    %145 = arith.cmpf one, %144, %144 : vector<8x1xf32>
    %146 = vector.broadcast %cst_47 : f32 to vector<8x1xf32>
    %147 = arith.addf %140, %146 : vector<8x1xf32>
    %148 = math.absf %144 : vector<8x1xf32>
    %cst_48 = arith.constant 0.000000e+00 : f32
    %149 = vector.broadcast %cst_48 : f32 to vector<8x1xf32>
    %150 = arith.subf %149, %148 : vector<8x1xf32>
    %151 = math.exp %150 : vector<8x1xf32>
    %152 = math.log1p %151 : vector<8x1xf32>
    %153 = arith.addf %142, %152 : vector<8x1xf32>
    %154 = arith.select %145, %147, %153 : vector<8x1xi1>, vector<8x1xf32>
    %155 = arith.addf %138, %154 : vector<8x1xf32>
    %156 = vector.broadcast %27 : f32 to vector<8x1xf32>
    %157 = arith.mulf %156, %155 : vector<8x1xf32>
    %158 = arith.addf %124, %157 : vector<8x1xf32>
    %cst_49 = arith.constant 0.000000e+00 : f32
    %159 = vector.broadcast %cst_49 : f32 to vector<8x1xf32>
    %160 = arith.subf %159, %87 : vector<8x1xf32>
    %cst_50 = arith.constant 0.000000e+00 : f32
    %161 = vector.broadcast %cst_50 : f32 to vector<8x1xf32>
    %162 = arith.maximumf %160, %161 : vector<8x1xf32>
    %163 = vector.broadcast %cst_50 : f32 to vector<8x1xf32>
    %164 = arith.subf %160, %163 : vector<8x1xf32>
    %165 = arith.cmpf one, %164, %164 : vector<8x1xf32>
    %166 = vector.broadcast %cst_50 : f32 to vector<8x1xf32>
    %167 = arith.addf %160, %166 : vector<8x1xf32>
    %168 = math.absf %164 : vector<8x1xf32>
    %cst_51 = arith.constant 0.000000e+00 : f32
    %169 = vector.broadcast %cst_51 : f32 to vector<8x1xf32>
    %170 = arith.subf %169, %168 : vector<8x1xf32>
    %171 = math.exp %170 : vector<8x1xf32>
    %172 = math.log1p %171 : vector<8x1xf32>
    %173 = arith.addf %162, %172 : vector<8x1xf32>
    %174 = arith.select %165, %167, %173 : vector<8x1xi1>, vector<8x1xf32>
    %cst_52 = arith.constant 0.000000e+00 : f32
    %175 = vector.broadcast %cst_52 : f32 to vector<8x1xf32>
    %176 = arith.maximumf %91, %175 : vector<8x1xf32>
    %177 = vector.broadcast %cst_52 : f32 to vector<8x1xf32>
    %178 = arith.subf %91, %177 : vector<8x1xf32>
    %179 = arith.cmpf one, %178, %178 : vector<8x1xf32>
    %180 = vector.broadcast %cst_52 : f32 to vector<8x1xf32>
    %181 = arith.addf %91, %180 : vector<8x1xf32>
    %182 = math.absf %178 : vector<8x1xf32>
    %cst_53 = arith.constant 0.000000e+00 : f32
    %183 = vector.broadcast %cst_53 : f32 to vector<8x1xf32>
    %184 = arith.subf %183, %182 : vector<8x1xf32>
    %185 = math.exp %184 : vector<8x1xf32>
    %186 = math.log1p %185 : vector<8x1xf32>
    %187 = arith.addf %176, %186 : vector<8x1xf32>
    %188 = arith.select %179, %181, %187 : vector<8x1xi1>, vector<8x1xf32>
    %189 = arith.addf %174, %188 : vector<8x1xf32>
    %190 = vector.broadcast %26 : f32 to vector<8x1xf32>
    %191 = arith.mulf %190, %189 : vector<8x1xf32>
    %192 = arith.subf %158, %191 : vector<8x1xf32>
    %193 = vector.shape_cast %192 : vector<8x1xf32> to vector<1x8x1xf32>
    %cst_54 = arith.constant dense<0.000000e+00> : vector<1xf32>
    %194 = vector.multi_reduction <add>, %193, %cst_54 [1, 2] : vector<1x8x1xf32> to vector<1xf32>
    %195 = vector.shape_cast %194 : vector<1xf32> to vector<1x1x1xf32>
    %196 = vector.extract %195[0, 0, 0] : f32 from vector<1x1x1xf32>
    %197 = vector.broadcast %196 : f32 to vector<1x1xf32>
    %c0_55 = arith.constant 0 : index
    %c0_56 = arith.constant 0 : index
    %c0_57 = arith.constant 0 : index
    %198 = vector.load %arg13[%c0_55, %c0_56, %c0_57] : memref<1x1x1xf32, #tpu.memory_space<vmem>>, vector<1x1x1xf32>
    %199 = vector.shape_cast %198 : vector<1x1x1xf32> to vector<1x1xf32>
    %200 = vector.shape_cast %197 : vector<1x1xf32> to vector<1x1x1xf32>
    tpu.vector_store %arg13[%c0_55, %c0_56, %c0_57], %200 {strides = array<i32>} : memref<1x1x1xf32, #tpu.memory_space<vmem>>, vector<1x1x1xf32>,
    return
  }
  func.func @transform_0(%arg0: i32, %arg1: memref<5xf32, #tpu.memory_space<smem>>) -> (i32, i32) {
    %c0_i32 = arith.constant 0 : i32
    %c0_i32_0 = arith.constant 0 : i32
    return %arg0, %c0_i32 : i32, i32
  }
  func.func @transform_1(%arg0: i32, %arg1: memref<5xf32, #tpu.memory_space<smem>>) -> (i32, i32) {
    %c0_i32 = arith.constant 0 : i32
    %c0_i32_0 = arith.constant 0 : i32
    return %arg0, %c0_i32 : i32, i32
  }
  func.func @transform_2(%arg0: i32, %arg1: memref<5xf32, #tpu.memory_space<smem>>) -> (i32, i32) {
    %c0_i32 = arith.constant 0 : i32
    %c0_i32_0 = arith.constant 0 : i32
    return %arg0, %c0_i32 : i32, i32
  }
  func.func @transform_3(%arg0: i32, %arg1: memref<5xf32, #tpu.memory_space<smem>>) -> (i32, i32) {
    %c0_i32 = arith.constant 0 : i32
    %c0_i32_0 = arith.constant 0 : i32
    return %arg0, %c0_i32 : i32, i32
  }
  func.func @transform_4(%arg0: i32, %arg1: memref<5xf32, #tpu.memory_space<smem>>) -> (i32, i32) {
    %c0_i32 = arith.constant 0 : i32
    %c0_i32_0 = arith.constant 0 : i32
    return %arg0, %c0_i32 : i32, i32
  }
  func.func @transform_5(%arg0: i32, %arg1: memref<5xf32, #tpu.memory_space<smem>>) -> (i32, i32) {
    %c0_i32 = arith.constant 0 : i32
    %c0_i32_0 = arith.constant 0 : i32
    return %arg0, %c0_i32 : i32, i32
  }
  func.func @transform_6(%arg0: i32, %arg1: memref<5xf32, #tpu.memory_space<smem>>) -> (i32, i32) {
    %c0_i32 = arith.constant 0 : i32
    %c0_i32_0 = arith.constant 0 : i32
    return %arg0, %c0_i32 : i32, i32
  }
  func.func @transform_7(%arg0: i32, %arg1: memref<5xf32, #tpu.memory_space<smem>>) -> (i32, i32) {
    %c0_i32 = arith.constant 0 : i32
    %c0_i32_0 = arith.constant 0 : i32
    %c0_i32_1 = arith.constant 0 : i32
    return %c0_i32, %c0_i32_0 : i32, i32
  }
  func.func @transform_8(%arg0: i32, %arg1: memref<5xf32, #tpu.memory_space<smem>>) -> (i32, i32) {
    %c0_i32 = arith.constant 0 : i32
    %c0_i32_0 = arith.constant 0 : i32
    %c0_i32_1 = arith.constant 0 : i32
    return %c0_i32, %c0_i32_0 : i32, i32
  }
  func.func @transform_9(%arg0: i32, %arg1: memref<5xf32, #tpu.memory_space<smem>>) -> (i32, i32) {
    %c0_i32 = arith.constant 0 : i32
    %c0_i32_0 = arith.constant 0 : i32
    %c0_i32_1 = arith.constant 0 : i32
    return %c0_i32, %c0_i32_0 : i32, i32
  }
  func.func @transform_10(%arg0: i32, %arg1: memref<5xf32, #tpu.memory_space<smem>>) -> (i32, i32) {
    %c0_i32 = arith.constant 0 : i32
    %c0_i32_0 = arith.constant 0 : i32
    %c0_i32_1 = arith.constant 0 : i32
    return %c0_i32, %c0_i32_0 : i32, i32
  }
  func.func @transform_11(%arg0: i32, %arg1: memref<5xf32, #tpu.memory_space<smem>>) -> (i32, i32, i32) {
    %c0_i32 = arith.constant 0 : i32
    %c0_i32_0 = arith.constant 0 : i32
    %c0_i32_1 = arith.constant 0 : i32
    return %arg0, %c0_i32, %c0_i32_0 : i32, i32, i32
  }
}

</mosaic_0001>

<llo_original>
// kernel: tpu_custom_call.1
$region0: #{tpu_custom_call.1}
  #allocation0 [shape = 'u32[]', space=smem, size = 0x4, offset = 0x4, fixed_abs, tag = 'smem constant byte address 0x4 - core index']
  #allocation1 [shape = 'u32[144,128]{1,0:T(1,128)}', space=vmem, size = 0x12000, scoped, tag = 'internal scratch']
  #allocation2 [shape = 's32[1]{0}', space=sflag, size = 0x4, scoped, tag = 'scoped memory for tpu_custom_call.1']
  #allocation3 [shape = 'u8[512]{0}', space=smem, size = 0x200, scoped, tag = 'prefetched SMEM operand 0']
  %s0 = inlined_call_operand.hbm [shape: f32[5], index: 0, kind: input, shape index: {}]
  %s1 = inlined_call_operand.hbm [shape: f32[8,32], index: 1, kind: input, shape index: {}]
  %s2 = inlined_call_operand.hbm [shape: f32[8,32], index: 2, kind: input, shape index: {}]
  %s3 = inlined_call_operand.vmem [shape: f32[8,32], index: 3, kind: input, shape index: {}]
  %s4 = inlined_call_operand.hbm [shape: f32[8,32], index: 4, kind: input, shape index: {}]
  %s5 = inlined_call_operand.vmem [shape: f32[8,32], index: 5, kind: input, shape index: {}]
  %s6 = inlined_call_operand.hbm [shape: f32[8,32], index: 6, kind: input, shape index: {}]
  %s7 = inlined_call_operand.vmem [shape: f32[8,32], index: 7, kind: input, shape index: {}]
  %s8 = inlined_call_operand.vmem [shape: f32[1,32], index: 8, kind: input, shape index: {}]
  %s9 = inlined_call_operand.vmem [shape: f32[1,32], index: 9, kind: input, shape index: {}]
  %s10 = inlined_call_operand.vmem [shape: f32[1,32], index: 10, kind: input, shape index: {}]
  %s11 = inlined_call_operand.vmem [shape: f32[1,32], index: 11, kind: input, shape index: {}]
  %s12 = inlined_call_operand.hbm [shape: f32[1,1,1], index: 12, kind: output, shape index: {}]
  %s13 = sld [smem:[#allocation0]]
  $region70: #{tpu_custom_call.1} parent=0
    _
  %s15 = ssub.s32 1, %s13
  %s16 = scalar_select 0, %s15, %s13
  %18 = dma.hbm_to_smem %s0, 16, [#allocation3], [#allocation2]
  %19 = dma.done [#allocation2], 16
  %20 = sfence
  $region1: #{tpu_custom_call.1} parent=0
    #allocation4 [shape = 'u8[4096]{0}', space=vmem, size = 0x1000, scoped, tag = 'input window, operand 1, single buffered']
    #allocation5 [shape = 's32[1]{0}', space=sflag, size = 0x4, scoped, tag = 'scoped memory for tpu_custom_call.1']
    #allocation6 [shape = 's32[1]{0}', space=sflag, size = 0x4, scoped, tag = 'scoped memory for tpu_custom_call.1']
    #allocation7 [shape = 'u8[4096]{0}', space=vmem, size = 0x1000, scoped, tag = 'input window, operand 2, single buffered']
    #allocation8 [shape = 's32[1]{0}', space=sflag, size = 0x4, scoped, tag = 'scoped memory for tpu_custom_call.1']
    #allocation9 [shape = 'u8[4096]{0}', space=vmem, size = 0x1000, scoped, tag = 'input window, operand 4, single buffered']
    #allocation10 [shape = 'u8[4096]{0}', space=vmem, size = 0x1000, scoped, tag = 'input window, operand 6, single buffered']
    #allocation11 [shape = 's32[1]{0}', space=sflag, size = 0x4, scoped, tag = 'scoped memory for tpu_custom_call.1']
    #allocation12 [shape = 'u8[512]{0}', space=vmem, size = 0x400, scoped, tag = 'output window, operand 0, single buffered']
    %21 = vsyncpa [#allocation5], 0
    %22 = vsyncpa [#allocation8], 0
    %23 = vsyncpa [#allocation11], 0
    %24 = vsyncpa [#allocation6], 0
    // Predicated region
    $region2: #{tpu_custom_call.1} parent=1 // pred_check
      _
    $region3: #{tpu_custom_call.1} parent=1 // pred_check_branch
      %26 = sbr.rel (0) target = $region5
    $region4: #{tpu_custom_call.1} parent=1 // pred_region
      %s28 = ssub.s32 128, 128
      %29 = vsyncadd [#allocation5], %s28
      %s31 = sshll.u32 [#allocation4], 4
      %s32 = int_to_ptr.vmem [resolvable:$true] %s31
      %34 = dma.hbm_to_vmem [thread:$0]  %s1, 128, %s32, [#allocation5]
    $region5: #{tpu_custom_call.1} parent=1 // pred_fallthru
      _
    // Predicated region
    $region6: #{tpu_custom_call.1} parent=1 // pred_check
      _
    $region7: #{tpu_custom_call.1} parent=1 // pred_check_branch
      %36 = sbr.rel (0) target = $region9
    $region8: #{tpu_custom_call.1} parent=1 // pred_region
      %s38 = ssub.s32 128, 128
      %39 = vsyncadd [#allocation8], %s38
      %s41 = sshll.u32 [#allocation7], 4
      %s42 = int_to_ptr.vmem [resolvable:$true] %s41
      %44 = dma.hbm_to_vmem [thread:$0]  %s2, 128, %s42, [#allocation8]
    $region9: #{tpu_custom_call.1} parent=1 // pred_fallthru
      _
    // Predicated region
    $region10: #{tpu_custom_call.1} parent=1 // pred_check
      _
    $region11: #{tpu_custom_call.1} parent=1 // pred_check_branch
      %46 = sbr.rel (0) target = $region13
    $region12: #{tpu_custom_call.1} parent=1 // pred_region
      _
    $region13: #{tpu_custom_call.1} parent=1 // pred_fallthru
      _
    // Predicated region
    $region14: #{tpu_custom_call.1} parent=1 // pred_check
      _
    $region15: #{tpu_custom_call.1} parent=1 // pred_check_branch
      %48 = sbr.rel (0) target = $region17
    $region16: #{tpu_custom_call.1} parent=1 // pred_region
      %s50 = ssub.s32 128, 128
      %51 = vsyncadd [#allocation8], %s50
      %s53 = sshll.u32 [#allocation9], 4
      %s54 = int_to_ptr.vmem [resolvable:$true] %s53
      %56 = dma.hbm_to_vmem [thread:$0]  %s4, 128, %s54, [#allocation8]
    $region17: #{tpu_custom_call.1} parent=1 // pred_fallthru
      _
    // Predicated region
    $region18: #{tpu_custom_call.1} parent=1 // pred_check
      _
    $region19: #{tpu_custom_call.1} parent=1 // pred_check_branch
      %58 = sbr.rel (0) target = $region21
    $region20: #{tpu_custom_call.1} parent=1 // pred_region
      _
    $region21: #{tpu_custom_call.1} parent=1 // pred_fallthru
      _
    // Predicated region
    $region22: #{tpu_custom_call.1} parent=1 // pred_check
      _
    $region23: #{tpu_custom_call.1} parent=1 // pred_check_branch
      %60 = sbr.rel (0) target = $region25
    $region24: #{tpu_custom_call.1} parent=1 // pred_region
      %s62 = ssub.s32 128, 128
      %63 = vsyncadd [#allocation11], %s62
      %s65 = sshll.u32 [#allocation10], 4
      %s66 = int_to_ptr.vmem [resolvable:$true] %s65
      %68 = dma.hbm_to_vmem [thread:$0]  %s6, 128, %s66, [#allocation11]
    $region25: #{tpu_custom_call.1} parent=1 // pred_fallthru
      _
    // Predicated region
    $region26: #{tpu_custom_call.1} parent=1 // pred_check
      _
    $region27: #{tpu_custom_call.1} parent=1 // pred_check_branch
      %70 = sbr.rel (0) target = $region29
    $region28: #{tpu_custom_call.1} parent=1 // pred_region
      _
    $region29: #{tpu_custom_call.1} parent=1 // pred_fallthru
      _
    // Predicated region
    $region30: #{tpu_custom_call.1} parent=1 // pred_check
      _
    $region31: #{tpu_custom_call.1} parent=1 // pred_check_branch
      %72 = sbr.rel (0) target = $region33
    $region32: #{tpu_custom_call.1} parent=1 // pred_region
      _
    $region33: #{tpu_custom_call.1} parent=1 // pred_fallthru
      _
    // Predicated region
    $region34: #{tpu_custom_call.1} parent=1 // pred_check
      _
    $region35: #{tpu_custom_call.1} parent=1 // pred_check_branch
      %74 = sbr.rel (0) target = $region37
    $region36: #{tpu_custom_call.1} parent=1 // pred_region
      _
    $region37: #{tpu_custom_call.1} parent=1 // pred_fallthru
      _
    // Predicated region
    $region38: #{tpu_custom_call.1} parent=1 // pred_check
      _
    $region39: #{tpu_custom_call.1} parent=1 // pred_check_branch
      %76 = sbr.rel (0) target = $region41
    $region40: #{tpu_custom_call.1} parent=1 // pred_region
      _
    $region41: #{tpu_custom_call.1} parent=1 // pred_fallthru
      _
    // Predicated region
    $region42: #{tpu_custom_call.1} parent=1 // pred_check
      _
    $region43: #{tpu_custom_call.1} parent=1 // pred_check_branch
      %78 = sbr.rel (0) target = $region45
    $region44: #{tpu_custom_call.1} parent=1 // pred_region
      _
    $region45: #{tpu_custom_call.1} parent=1 // pred_fallthru
      _
    // Predicated region
    $region46: #{tpu_custom_call.1} parent=1 // pred_check
      _
    $region47: #{tpu_custom_call.1} parent=1 // pred_check_branch
      %80 = sbr.rel (0) target = $region49
    $region48: #{tpu_custom_call.1} parent=1 // pred_region
      %81 = dma.done [#allocation5], 128
    $region49: #{tpu_custom_call.1} parent=1 // pred_fallthru
      _
    // Predicated region
    $region50: #{tpu_custom_call.1} parent=1 // pred_check
      _
    $region51: #{tpu_custom_call.1} parent=1 // pred_check_branch
      %83 = sbr.rel (0) target = $region53
    $region52: #{tpu_custom_call.1} parent=1 // pred_region
      %84 = dma.done [#allocation8], 128
    $region53: #{tpu_custom_call.1} parent=1 // pred_fallthru
      _
    // Predicated region
    $region54: #{tpu_custom_call.1} parent=1 // pred_check
      _
    $region55: #{tpu_custom_call.1} parent=1 // pred_check_branch
      %86 = sbr.rel (0) target = $region57
    $region56: #{tpu_custom_call.1} parent=1 // pred_region
      %87 = dma.done [#allocation8], 128
    $region57: #{tpu_custom_call.1} parent=1 // pred_fallthru
      _
    // Predicated region
    $region58: #{tpu_custom_call.1} parent=1 // pred_check
      _
    $region59: #{tpu_custom_call.1} parent=1 // pred_check_branch
      %89 = sbr.rel (0) target = $region61
    $region60: #{tpu_custom_call.1} parent=1 // pred_region
      %90 = dma.done [#allocation11], 128
    $region61: #{tpu_custom_call.1} parent=1 // pred_fallthru
      _
    %v91 = vld [vmem:[%s5] sm:$0xff]
    %v92 = vmax.f32 %v91, 0.0
    %v93 = vld [vmem:[#allocation4] sm:$0xff]
    %v94 = vmax.f32 %v93, 0.0
    %v95 = vld [vmem:[#allocation7] sm:$0xff]
    %v96 = vmax.f32 %v95, 0.0
    %v97 = vld [vmem:[%s3] sm:$0xff]
    %v98 = vmax.f32 %v97, 0.0
    %v99 = vld [vmem:[#allocation9] sm:$0xff]
    %v100 = vmax.f32 %v99, 0.0
    %v101 = vld [vmem:[#allocation10] sm:$0xff]
    %v102 = vmax.f32 %v101, 0.0
    %v103 = vld [vmem:[%s7] sm:$0xff]
    %v104 = vmax.f32 %v103, 0.0
    %v105 = vld [vmem:[%s8] sm:$0x1]
    %v106 = vld [vmem:[%s9] sm:$0x1]
    %v107 = vld [vmem:[%s10] sm:$0x1]
    %v108 = vld [vmem:[%s11] sm:$0x1]
    %s109 = sld [smem:[#allocation3]]
    %s110 = sld [smem:[#allocation3 + $0x1]]
    %s111 = sld [smem:[#allocation3 + $0x2]]
    %s112 = sld [smem:[#allocation3 + $0x3]]
    %s113 = sld [smem:[#allocation3 + $0x4]]
    %v115 = vlaneseq
    %v116 = vshrl.u32 %v115, 7
    %v117 = vsub.s32 0, %v116
    %v118 = vrot.slane %v105, %v117
    %v120 = vmul.f32 %v92, %v118
    %vm121 = vcmask 261120
    %v122 = vsel %vm121, %v120, 0.0
    %123 = vadd.xlane.f32.xlu0 %v122
    %v124 = vpop.xlane.xlu0 %123
    %v126 = vlaneseq
    %v127 = vshrl.u32 %v126, 7
    %v128 = vsub.s32 0, %v127
    %v129 = vrot.slane %v106, %v128
    %v131 = vmul.f32 %v92, %v129
    %v132 = vsel %vm121, %v131, 0.0
    %133 = vadd.xlane.f32.xlu0 %v132
    %v134 = vpop.xlane.xlu0 %133
    %v136 = vlaneseq
    %v137 = vshrl.u32 %v136, 7
    %v138 = vsub.s32 0, %v137
    %v139 = vrot.slane %v108, %v138
    %v141 = vmul.f32 %v92, %v139
    %v142 = vsel %vm121, %v141, 0.0
    %143 = vadd.xlane.f32.xlu0 %v142
    %v144 = vpop.xlane.xlu0 %143
    %v145 = vmul.f32 %v98, %v129
    %v146 = vsel %vm121, %v145, 0.0
    %147 = vadd.xlane.f32.xlu0 %v146
    %v148 = vpop.xlane.xlu0 %147
    %v149 = vadd.f32 %v124, %v148
    %v150 = vstv %s112
    %v151 = vadd.f32 %v149, %v150
    %v152 = vmul.f32 %v100, %v129
    %v153 = vsel %vm121, %v152, 0.0
    %154 = vadd.xlane.f32.xlu0 %v153
    %v155 = vpop.xlane.xlu0 %154
    %v156 = vadd.f32 %v124, %v155
    %v157 = vadd.f32 %v156, %v150
    %v158 = vmul.f32 %v94, %v118
    %v159 = vsel %vm121, %v158, 0.0
    %160 = vadd.xlane.f32.xlu0 %v159
    %v161 = vpop.xlane.xlu0 %160
    %v162 = vadd.f32 %v161, %v134
    %v163 = vadd.f32 %v162, %v150
    %v164 = vmul.f32 %v96, %v118
    %v165 = vsel %vm121, %v164, 0.0
    %166 = vadd.xlane.f32.xlu0 %v165
    %v167 = vpop.xlane.xlu0 %166
    %v168 = vadd.f32 %v167, %v134
    %v169 = vadd.f32 %v168, %v150
    %v171 = vlaneseq
    %v172 = vshrl.u32 %v171, 7
    %v173 = vsub.s32 0, %v172
    %v174 = vrot.slane %v107, %v173
    %v176 = vmul.f32 %v102, %v174
    %v177 = vsel %vm121, %v176, 0.0
    %178 = vadd.xlane.f32.xlu0 %v177
    %v179 = vpop.xlane.xlu0 %178
    %v180 = vadd.f32 %v179, %v144
    %v181 = vstv %s113
    %v182 = vadd.f32 %v180, %v181
    %v183 = vmul.f32 %v104, %v174
    %v184 = vsel %vm121, %v183, 0.0
    %185 = vadd.xlane.f32.xlu0 %v184
    %v186 = vpop.xlane.xlu0 %185
    %v187 = vadd.f32 %v186, %v144
    %v188 = vadd.f32 %v187, %v181
    %v189 = vand.u32 2147483647, %v182
    %v190 = vmax.f32 %v189, 1e-12
    %v191 = vrcp.pop %v190
    %v192 = vmul.f32 %v182, %v191
    %v193 = vand.u32 2147483647, %v188
    %v194 = vmax.f32 %v193, 1e-12
    %v195 = vrcp.pop %v194
    %v196 = vmul.f32 %v188, %v195
    %v197 = vmax.f32 %v157, 0.0
    %vm198 = vcmp.ne.f32.partialorder %v157, %v157
    %v199 = vadd.f32 %v157, 0.0
    %v200 = vand.u32 2147483647, %v157
    %v201 = vsub.f32 0.0, %v200
    %v202 = vmul.f32 %v201, 1.442695
    %v203 = vpow.pop %v202
    %v204 = vadd.f32 %v203, 1.0
    %v205 = vlog2.pop %v204
    %v206 = vmul.f32 %v205, 0.6931472
    %v207 = vmul.f32 -0.5, %v203
    %v208 = vadd.f32 %v207, 1.0
    %v209 = vmul.f32 %v208, %v203
    %v210 = vand.u32 2147483647, %v203
    %vm211 = vcmp.lt.f32.partialorder %v210, 0.0004427343
    %v212 = vsel %vm211, %v209, %v206
    %v213 = vadd.f32 %v197, %v212
    %v214 = vsel %vm198, %v199, %v213
    %v215 = vsub.f32 0.0, %v151
    %v216 = vmax.f32 %v215, 0.0
    %vm217 = vcmp.ne.f32.partialorder %v215, %v215
    %v218 = vadd.f32 %v215, 0.0
    %v219 = vand.u32 2147483647, %v215
    %v220 = vsub.f32 0.0, %v219
    %v221 = vmul.f32 %v220, 1.442695
    %v222 = vpow.pop %v221
    %v223 = vadd.f32 %v222, 1.0
    %v224 = vlog2.pop %v223
    %v225 = vmul.f32 %v224, 0.6931472
    %v226 = vmul.f32 -0.5, %v222
    %v227 = vadd.f32 %v226, 1.0
    %v228 = vmul.f32 %v227, %v222
    %v229 = vand.u32 2147483647, %v222
    %vm230 = vcmp.lt.f32.partialorder %v229, 0.0004427343
    %v231 = vsel %vm230, %v228, %v225
    %v232 = vadd.f32 %v216, %v231
    %v233 = vsel %vm217, %v218, %v232
    %v234 = vadd.f32 %v214, %v233
    %v235 = vstv %s109
    %v236 = vmul.f32 %v235, %v234
    %v237 = vmax.f32 %v169, 0.0
    %vm238 = vcmp.ne.f32.partialorder %v169, %v169
    %v239 = vadd.f32 %v169, 0.0
    %v240 = vand.u32 2147483647, %v169
    %v241 = vsub.f32 0.0, %v240
    %v242 = vmul.f32 %v241, 1.442695
    %v243 = vpow.pop %v242
    %v244 = vadd.f32 %v243, 1.0
    %v245 = vlog2.pop %v244
    %v246 = vmul.f32 %v245, 0.6931472
    %v247 = vmul.f32 -0.5, %v243
    %v248 = vadd.f32 %v247, 1.0
    %v249 = vmul.f32 %v248, %v243
    %v250 = vand.u32 2147483647, %v243
    %vm251 = vcmp.lt.f32.partialorder %v250, 0.0004427343
    %v252 = vsel %vm251, %v249, %v246
    %v253 = vadd.f32 %v237, %v252
    %v254 = vsel %vm238, %v239, %v253
    %v255 = vsub.f32 0.0, %v163
    %v256 = vmax.f32 %v255, 0.0
    %vm257 = vcmp.ne.f32.partialorder %v255, %v255
    %v258 = vadd.f32 %v255, 0.0
    %v259 = vand.u32 2147483647, %v255
    %v260 = vsub.f32 0.0, %v259
    %v261 = vmul.f32 %v260, 1.442695
    %v262 = vpow.pop %v261
    %v263 = vadd.f32 %v262, 1.0
    %v264 = vlog2.pop %v263
    %v265 = vmul.f32 %v264, 0.6931472
    %v266 = vmul.f32 -0.5, %v262
    %v267 = vadd.f32 %v266, 1.0
    %v268 = vmul.f32 %v267, %v262
    %v269 = vand.u32 2147483647, %v262
    %vm270 = vcmp.lt.f32.partialorder %v269, 0.0004427343
    %v271 = vsel %vm270, %v268, %v265
    %v272 = vadd.f32 %v256, %v271
    %v273 = vsel %vm257, %v258, %v272
    %v274 = vadd.f32 %v254, %v273
    %v275 = vstv %s111
    %v276 = vmul.f32 %v275, %v274
    %v277 = vadd.f32 %v236, %v276
    %v278 = vsub.f32 0.0, %v192
    %v279 = vmax.f32 %v278, 0.0
    %vm280 = vcmp.ne.f32.partialorder %v278, %v278
    %v281 = vadd.f32 %v278, 0.0
    %v282 = vand.u32 2147483647, %v278
    %v283 = vsub.f32 0.0, %v282
    %v284 = vmul.f32 %v283, 1.442695
    %v285 = vpow.pop %v284
    %v286 = vadd.f32 %v285, 1.0
    %v287 = vlog2.pop %v286
    %v288 = vmul.f32 %v287, 0.6931472
    %v289 = vmul.f32 -0.5, %v285
    %v290 = vadd.f32 %v289, 1.0
    %v291 = vmul.f32 %v290, %v285
    %v292 = vand.u32 2147483647, %v285
    %vm293 = vcmp.lt.f32.partialorder %v292, 0.0004427343
    %v294 = vsel %vm293, %v291, %v288
    %v295 = vadd.f32 %v279, %v294
    %v296 = vsel %vm280, %v281, %v295
    %v297 = vmax.f32 %v196, 0.0
    %vm298 = vcmp.ne.f32.partialorder %v196, %v196
    %v299 = vadd.f32 %v196, 0.0
    %v300 = vand.u32 2147483647, %v196
    %v301 = vsub.f32 0.0, %v300
    %v302 = vmul.f32 %v301, 1.442695
    %v303 = vpow.pop %v302
    %v304 = vadd.f32 %v303, 1.0
    %v305 = vlog2.pop %v304
    %v306 = vmul.f32 %v305, 0.6931472
    %v307 = vmul.f32 -0.5, %v303
    %v308 = vadd.f32 %v307, 1.0
    %v309 = vmul.f32 %v308, %v303
    %v310 = vand.u32 2147483647, %v303
    %vm311 = vcmp.lt.f32.partialorder %v310, 0.0004427343
    %v312 = vsel %vm311, %v309, %v306
    %v313 = vadd.f32 %v297, %v312
    %v314 = vsel %vm298, %v299, %v313
    %v315 = vadd.f32 %v296, %v314
    %v316 = vstv %s110
    %v317 = vmul.f32 %v316, %v315
    %v318 = vsub.f32 %v277, %v317
    %vm319 = vcmask 7168
    %v320 = vsel %vm319, %v318, 0.0
    %321 = vadd.xlane.f32.xlu0 %v320
    %v322 = vpop.xlane.xlu0 %321
    %v323 = vrot.slane %v322, 4
    %v324 = vadd.f32 %v322, %v323
    %v325 = vrot.slane %v324, 2
    %v326 = vadd.f32 %v324, %v325
    %v327 = vrot.slane %v326, 1
    %v328 = vadd.f32 %v326, %v327
    %s329 = vtos %v328
    %v330 = vstv %s329
    %vm331 = vcmask 0
    %332 = vst.msk [vmem:[#allocation12] sm:$0x1] %vm331, %v330
    // Predicated region
    $region62: #{tpu_custom_call.1} parent=1 // pred_check
      _
    $region63: #{tpu_custom_call.1} parent=1 // pred_check_branch
      %334 = sbr.rel (0) target = $region65
    $region64: #{tpu_custom_call.1} parent=1 // pred_region
      %s336 = ssub.s32 16, 16
      %337 = vsyncadd [#allocation6], %s336
      %s339 = sshll.u32 [#allocation12], 4
      %s340 = int_to_ptr.vmem [resolvable:$true] %s339
      %342 = dma.vmem_to_hbm [thread:$0]  %s340, 16, %s12, [#allocation6]
    $region65: #{tpu_custom_call.1} parent=1 // pred_fallthru
      _
    // Predicated region
    $region66: #{tpu_custom_call.1} parent=1 // pred_check
      _
    $region67: #{tpu_custom_call.1} parent=1 // pred_check_branch
      %344 = sbr.rel (0) target = $region69
    $region68: #{tpu_custom_call.1} parent=1 // pred_region
      %345 = dma.done [#allocation6], 16
    $region69: #{tpu_custom_call.1} parent=1 // pred_fallthru
      _
    %346 = vsyncpa [#allocation5], 1
    %347 = vsyncpa [#allocation8], 1
    %348 = vsyncpa [#allocation11], 1
    %349 = vsyncpa [#allocation6], 1

</llo_original>
